<compile_context>
chip_gen: v7x
topology: tpu7x:2x2x1
jax: 0.10.0
libtpu: 0.0.40
codegen_flags: <defaults>
</compile_context>

<pallas_src>
import functools

import jax
import jax.numpy as jnp
from jax import lax
from jax.experimental import pallas as pl
from jax.experimental.pallas import tpu as pltpu


_VMEM_LIMIT_BYTES = 48 * 1024 * 1024   # explicit scoped-VMEM request: safe on
                                        # v5e/v6e (128 MiB phys) and v7x (64 MiB)
_VMEM_TILE_BUDGET = 40 * 1024 * 1024   # working-set budget used to size the x tile


def _patch_merger_kernel(x_ref, q_ref, g_ref, b_ref, o_ref,
                         m_sc, l_sc, acc_sc, *,
                         eps, n_tokens, block_n, needs_mask,
                         compute_dtype, approx_recip):
    # x_ref: (1, tn, D)   q_ref: (Tp, D) [scale pre-folded]   g_ref/b_ref: (1, D)
    # o_ref: (1, Tp, D)   scratch: m/l (Tp, 1) f32, acc (Tp, D) f32
    k = pl.program_id(1)
    cdt = compute_dtype

    @pl.when(k == 0)
    def _init():
        m_sc[...] = jnp.full_like(m_sc, -jnp.inf)
        l_sc[...] = jnp.zeros_like(l_sc)
        acc_sc[...] = jnp.zeros_like(acc_sc)

    # ---- LayerNorm: stats in f32 (single data pass), elementwise in the
    #      compute dtype (bf16 fast path) so only one low-precision copy of
    #      the tile is live going into the two MXU matmuls. ----
    xt = x_ref[0]                                            # (tn, D) storage dtype
    xt32 = xt.astype(jnp.float32)
    mean = jnp.mean(xt32, axis=-1, keepdims=True)            # (tn, 1) f32
    ex2 = jnp.mean(xt32 * xt32, axis=-1, keepdims=True)
    var = jnp.maximum(ex2 - mean * mean, 0.0)                # guard cancellation
    inv = lax.rsqrt(var + eps)                               # (tn, 1) f32 (EUP)

    xn = ((xt.astype(cdt) - mean.astype(cdt)) * inv.astype(cdt)) \
        * g_ref[...] + b_ref[...]                            # (tn, D) cdt

    if needs_mask:
        # Ragged last tile: out-of-range rows of the VMEM buffer may hold
        # stale / uninitialized data (possibly NaN); zero them so the
        # p @ xn matmul stays clean.  Emitted only when N % tn != 0.
        row_valid = (k * block_n + lax.broadcasted_iota(
            jnp.int32, (block_n, 1), 0)) < n_tokens
        xn = jnp.where(row_valid, xn, jnp.zeros((), cdt))

    # ---- sim = (scale*Q) @ xn^T, contraction on D of both operands
    #      (no transpose materialized), f32 accumulation. ----
    sim = lax.dot_general(q_ref[...], xn, (((1,), (1,)), ((), ())),
                          preferred_element_type=jnp.float32)   # (Tp, tn)

    if needs_mask:
        col_valid = (k * block_n + lax.broadcasted_iota(
            jnp.int32, (1, block_n), 1)) < n_tokens
        sim = jnp.where(col_valid, sim, -jnp.inf)

    # ---- online softmax update ----
    m_prev = m_sc[...]
    m_new = jnp.maximum(m_prev, jnp.max(sim, axis=-1, keepdims=True))
    alpha = jnp.exp(m_prev - m_new)                           # 0 at k==0
    p = jnp.exp(sim - m_new)                                  # (Tp, tn)
    l_sc[...] = alpha * l_sc[...] + jnp.sum(p, axis=-1, keepdims=True)
    acc_sc[...] = alpha * acc_sc[...] + jnp.dot(
        p.astype(cdt), xn, preferred_element_type=jnp.float32)
    m_sc[...] = m_new

    @pl.when(k == pl.num_programs(1) - 1)
    def _finalize():
        inv_l = pl.reciprocal(l_sc[...], approx=approx_recip)
        o_ref[0] = (acc_sc[...] * inv_l).astype(o_ref.dtype)


def _auto_block_n(D, x_itemsize, cdt_itemsize):
    """Token-tile rows sized against a ~40 MiB live-VMEM working budget."""
    per_row = D * (2 * x_itemsize        # double-buffered x tile
                   + 2 * 4               # transient f32 stats temporaries
                   + 2 * cdt_itemsize)   # normalized tile + matmul-operand copy
    budget = _VMEM_TILE_BUDGET - (2 * 1024 * 1024)   # queries/out/acc/sim + margin
    tn = budget // max(per_row, 1)
    tn = max(128, min(int(tn), 8192))
    return (tn // 128) * 128             # lane-aligned contraction / sim width


def patch_merger(x, queries, gamma, beta, *, eps=1e-5, block_n=None,
                 matmul_dtype=jnp.bfloat16):
    """x: (B, N, D); queries: (T, D); gamma/beta: (D,). Returns (B, T, D).

    matmul_dtype: dtype of the MXU operands and of the LayerNorm elementwise
    path (bf16 default; f32 for bit-tight comparison against an f32 reference).
    Accumulation is always f32.
    """
    B, N, D = x.shape
    T = queries.shape[0]
    scale = float(D) ** -0.5
    out_dtype = x.dtype
    cdt = jnp.dtype(matmul_dtype)

    # Pad the query count to a sublane multiple so (Tp, D) output stores are
    # unmasked; fold the similarity scale into the queries and pre-cast them
    # (hoists per-tile VPU work out of the B x n_tiles loop).
    Tp = ((T + 7) // 8) * 8
    q_prep = (queries.astype(jnp.float32) * scale).astype(cdt)
    if Tp != T:
        q_prep = jnp.concatenate(
            [q_prep, jnp.zeros((Tp - T, D), cdt)], axis=0)

    gamma2 = gamma.reshape(1, D).astype(cdt)
    beta2 = beta.reshape(1, D).astype(cdt)

    if block_n is None:
        block_n = _auto_block_n(D, jnp.dtype(x.dtype).itemsize, cdt.itemsize)
    else:
        block_n = max(8, (int(block_n) // 8) * 8)     # sublane-aligned
    tn = N if block_n >= N else block_n               # full-extent block if it fits
    n_tiles = pl.cdiv(N, tn)
    needs_mask = (N % tn) != 0

    kernel = functools.partial(
        _patch_merger_kernel,
        eps=eps, n_tokens=N, block_n=tn, needs_mask=needs_mask,
        compute_dtype=cdt, approx_recip=(cdt != jnp.dtype(jnp.float32)))

    out = pl.pallas_call(
        kernel,
        out_shape=jax.ShapeDtypeStruct((B, Tp, D), out_dtype),
        grid_spec=pltpu.PrefetchScalarGridSpec(
            num_scalar_prefetch=0,
            grid=(B, n_tiles),
            in_specs=[
                pl.BlockSpec((1, tn, D), lambda b, k: (b, k, 0)),   # x tile
                pl.BlockSpec((Tp, D), lambda b, k: (0, 0)),         # scaled queries
                pl.BlockSpec((1, D), lambda b, k: (0, 0)),          # gamma
                pl.BlockSpec((1, D), lambda b, k: (0, 0)),          # beta
            ],
            out_specs=pl.BlockSpec((1, Tp, D), lambda b, k: (b, 0, 0)),
            scratch_shapes=[
                pltpu.VMEM((Tp, 1), jnp.float32),    # running max m
                pltpu.VMEM((Tp, 1), jnp.float32),    # running denom l
                pltpu.VMEM((Tp, D), jnp.float32),    # f32 accumulator
            ],
        ),
        compiler_params=pltpu.CompilerParams(
            dimension_semantics=("parallel", "arbitrary"),
            vmem_limit_bytes=_VMEM_LIMIT_BYTES),
    )(x, q_prep, gamma2, beta2)

    return out[:, :T, :] if Tp != T else out


def patch_merger_ref(x, queries, gamma, beta, *, eps=1e-5):
    """Pure-JAX reference mirroring the PyTorch forward."""
    x32 = x.astype(jnp.float32)
    mean = jnp.mean(x32, axis=-1, keepdims=True)
    var = jnp.mean((x32 - mean) ** 2, axis=-1, keepdims=True)
    xn = (x32 - mean) / jnp.sqrt(var + eps) * gamma + beta
    scale = float(x.shape[-1]) ** -0.5
    sim = jnp.einsum("td,bnd->btn", queries.astype(jnp.float32), xn) * scale
    attn = jax.nn.softmax(sim, axis=-1)
    return jnp.einsum("btn,bnd->btd", attn, xn).astype(x.dtype)


if __name__ == "__main__":
    key = jax.random.PRNGKey(0)
    k1, k2, k3, k4, k5, k6 = jax.random.split(key, 6)

    # --- Case 1: tiny single-tile, exact f32 path (tight tolerance) ---
    B, N, D, T = 2, 8, 32, 4
    x = jax.random.normal(k1, (B, N, D), dtype=jnp.float32)
    q = jax.random.normal(k2, (T, D), dtype=jnp.float32)
    gamma = jnp.ones((D,), jnp.float32)
    beta = jnp.zeros((D,), jnp.float32)
    out = jax.block_until_ready(
        patch_merger(x, q, gamma, beta, matmul_dtype=jnp.float32))
    ref = patch_merger_ref(x, q, gamma, beta)
    assert out.shape == (B, T, D)
    assert jnp.allclose(out, ref, atol=1e-5, rtol=1e-5), "case1 mismatch"

    # --- Case 2: tiled N (ragged last tile) + padded T, exact f32 path ---
    B, N, D, T = 2, 200, 128, 5
    x = jax.random.normal(k3, (B, N, D), dtype=jnp.float32)
    q = jax.random.normal(k4, (T, D), dtype=jnp.float32)
    gamma = 1.0 + 0.1 * jax.random.normal(k5, (D,), dtype=jnp.float32)
    beta = 0.1 * jax.random.normal(k6, (D,), dtype=jnp.float32)
    out = jax.block_until_ready(
        patch_merger(x, q, gamma, beta, block_n=64, matmul_dtype=jnp.float32))
    ref = patch_merger_ref(x, q, gamma, beta)
    assert out.shape == (B, T, D)
    assert jnp.allclose(out, ref, atol=1e-4, rtol=1e-4), "case2 mismatch"

    # --- Case 3a: same shapes, fast path with explicit tiling (bf16 + approx) ---
    out_bf = jax.block_until_ready(patch_merger(x, q, gamma, beta, block_n=64))
    assert out_bf.shape == (B, T, D)
    rel_err = jnp.linalg.norm(out_bf.astype(jnp.float32) - ref) / jnp.linalg.norm(ref)
    assert float(rel_err) < 2e-2, f"case3a bf16 rel err too large: {rel_err}"

    # --- Case 3b: fast path with the default auto tile size ---
    out_auto = jax.block_until_ready(patch_merger(x, q, gamma, beta))
    rel_err = jnp.linalg.norm(out_auto.astype(jnp.float32) - ref) / jnp.linalg.norm(ref)
    assert float(rel_err) < 2e-2, f"case3b bf16 rel err too large: {rel_err}"

    print("KERNEL_OK")
</pallas_src>

<mosaic_0001>
module attributes {stable_mosaic.version = 11 : i64} {
  func.func @_patch_merger_kernel(%arg0: i32, %arg1: i32, %arg2: memref<1x8x32xf32, #tpu.memory_space<vmem>>, %arg3: memref<8x32xf32, #tpu.memory_space<vmem>>, %arg4: memref<1x32xf32, #tpu.memory_space<vmem>>, %arg5: memref<1x32xf32, #tpu.memory_space<vmem>>, %arg6: memref<1x8x32xf32, #tpu.memory_space<vmem>>, %arg7: memref<8x1xf32, #tpu.memory_space<vmem>>, %arg8: memref<8x1xf32, #tpu.memory_space<vmem>>, %arg9: memref<8x32xf32, #tpu.memory_space<vmem>>) attributes {dimension_semantics = [#tpu.dimension_semantics<parallel>, #tpu.dimension_semantics<arbitrary>], iteration_bounds = array<i64: 2, 1>, scalar_prefetch = 0 : i64, scratch_operands = 3 : i64, tpu.core_type = #tpu.core_type<tc>, window_params = [{transform_indices = @transform_0, window_bounds = array<i64: 1, 8, 32>}, {pipeline_mode = #tpu.pipeline_mode<synchronous>, transform_indices = @transform_1, window_bounds = array<i64: 8, 32>}, {pipeline_mode = #tpu.pipeline_mode<synchronous>, transform_indices = @transform_2, window_bounds = array<i64: 1, 32>}, {pipeline_mode = #tpu.pipeline_mode<synchronous>, transform_indices = @transform_3, window_bounds = array<i64: 1, 32>}, {transform_indices = @transform_4, window_bounds = array<i64: 1, 8, 32>}]} {
    %c0_i32 = arith.constant 0 : i32
    %0 = arith.cmpi eq, %arg1, %c0_i32 : i32
    %1 = arith.extui %0 : i1 to i32
    %c0_i32_0 = arith.constant 0 : i32
    %2 = arith.cmpi ne, %1, %c0_i32_0 : i32
    scf.if %2 {
      %cst_32 = arith.constant 0xFF800000 : f32
      %58 = vector.broadcast %cst_32 : f32 to vector<8x1xf32>
      %c0_33 = arith.constant 0 : index
      %c0_34 = arith.constant 0 : index
      %59 = vector.load %arg7[%c0_33, %c0_34] : memref<8x1xf32, #tpu.memory_space<vmem>>, vector<8x1xf32>
      tpu.vector_store %arg7[%c0_33, %c0_34], %58 {strides = array<i32>} : memref<8x1xf32, #tpu.memory_space<vmem>>, vector<8x1xf32>,
      %cst_35 = arith.constant 0.000000e+00 : f32
      %60 = vector.broadcast %cst_35 : f32 to vector<8x1xf32>
      %c0_36 = arith.constant 0 : index
      %c0_37 = arith.constant 0 : index
      %61 = vector.load %arg8[%c0_36, %c0_37] : memref<8x1xf32, #tpu.memory_space<vmem>>, vector<8x1xf32>
      tpu.vector_store %arg8[%c0_36, %c0_37], %60 {strides = array<i32>} : memref<8x1xf32, #tpu.memory_space<vmem>>, vector<8x1xf32>,
      %cst_38 = arith.constant 0.000000e+00 : f32
      %62 = vector.broadcast %cst_38 : f32 to vector<8x32xf32>
      %c0_39 = arith.constant 0 : index
      %c0_40 = arith.constant 0 : index
      %63 = vector.load %arg9[%c0_39, %c0_40] : memref<8x32xf32, #tpu.memory_space<vmem>>, vector<8x32xf32>
      tpu.vector_store %arg9[%c0_39, %c0_40], %62 {strides = array<i32>} : memref<8x32xf32, #tpu.memory_space<vmem>>, vector<8x32xf32>,
    } else {
    }
    %c0 = arith.constant 0 : index
    %c0_1 = arith.constant 0 : index
    %c0_2 = arith.constant 0 : index
    %3 = vector.load %arg2[%c0, %c0_1, %c0_2] : memref<1x8x32xf32, #tpu.memory_space<vmem>>, vector<1x8x32xf32>
    %4 = vector.shape_cast %3 : vector<1x8x32xf32> to vector<8x32xf32>
    %cst = arith.constant dense<0.000000e+00> : vector<8xf32>
    %5 = vector.multi_reduction <add>, %4, %cst [1] : vector<8x32xf32> to vector<8xf32>
    %6 = vector.shape_cast %5 : vector<8xf32> to vector<8x1xf32>
    %cst_3 = arith.constant 3.200000e+01 : f32
    %7 = vector.broadcast %cst_3 : f32 to vector<8x1xf32>
    %8 = arith.divf %6, %7 : vector<8x1xf32>
    %9 = arith.mulf %4, %4 : vector<8x32xf32>
    %cst_4 = arith.constant dense<0.000000e+00> : vector<8xf32>
    %10 = vector.multi_reduction <add>, %9, %cst_4 [1] : vector<8x32xf32> to vector<8xf32>
    %11 = vector.shape_cast %10 : vector<8xf32> to vector<8x1xf32>
    %cst_5 = arith.constant 3.200000e+01 : f32
    %12 = vector.broadcast %cst_5 : f32 to vector<8x1xf32>
    %13 = arith.divf %11, %12 : vector<8x1xf32>
    %14 = arith.mulf %8, %8 : vector<8x1xf32>
    %15 = arith.subf %13, %14 : vector<8x1xf32>
    %cst_6 = arith.constant 0.000000e+00 : f32
    %16 = vector.broadcast %cst_6 : f32 to vector<8x1xf32>
    %17 = arith.maximumf %15, %16 : vector<8x1xf32>
    %cst_7 = arith.constant 9.99999974E-6 : f32
    %18 = vector.broadcast %cst_7 : f32 to vector<8x1xf32>
    %19 = arith.addf %17, %18 : vector<8x1xf32>
    %20 = math.rsqrt %19 : vector<8x1xf32>
    %21 = vector.broadcast %8 : vector<8x1xf32> to vector<8x32xf32>
    %22 = arith.subf %4, %21 : vector<8x32xf32>
    %23 = vector.broadcast %20 : vector<8x1xf32> to vector<8x32xf32>
    %24 = arith.mulf %22, %23 : vector<8x32xf32>
    %c0_8 = arith.constant 0 : index
    %c0_9 = arith.constant 0 : index
    %25 = vector.load %arg4[%c0_8, %c0_9] : memref<1x32xf32, #tpu.memory_space<vmem>>, vector<1x32xf32>
    %26 = vector.broadcast %25 : vector<1x32xf32> to vector<8x32xf32>
    %27 = arith.mulf %24, %26 : vector<8x32xf32>
    %c0_10 = arith.constant 0 : index
    %c0_11 = arith.constant 0 : index
    %28 = vector.load %arg5[%c0_10, %c0_11] : memref<1x32xf32, #tpu.memory_space<vmem>>, vector<1x32xf32>
    %29 = vector.broadcast %28 : vector<1x32xf32> to vector<8x32xf32>
    %30 = arith.addf %27, %29 : vector<8x32xf32>
    %c0_12 = arith.constant 0 : index
    %c0_13 = arith.constant 0 : index
    %31 = vector.load %arg3[%c0_12, %c0_13] : memref<8x32xf32, #tpu.memory_space<vmem>>, vector<8x32xf32>
    %cst_14 = arith.constant dense<0.000000e+00> : vector<8x8xf32>
    %32 = tpu.matmul %31, %30, %cst_14 {dimension_numbers = #tpu.dot_dimension_numbers<[1], [1], [0], [0], [0, 0, 1, 0], [], []>} : vector<8x32xf32>, vector<8x32xf32>, vector<8x8xf32> -> vector<8x8xf32>
    %c0_15 = arith.constant 0 : index
    %c0_16 = arith.constant 0 : index
    %33 = vector.load %arg7[%c0_15, %c0_16] : memref<8x1xf32, #tpu.memory_space<vmem>>, vector<8x1xf32>
    %cst_17 = arith.constant dense<0xFF800000> : vector<8xf32>
    %34 = vector.multi_reduction <maximumf>, %32, %cst_17 [1] : vector<8x8xf32> to vector<8xf32>
    %35 = vector.shape_cast %34 : vector<8xf32> to vector<8x1xf32>
    %36 = arith.maximumf %33, %35 : vector<8x1xf32>
    %37 = arith.subf %33, %36 : vector<8x1xf32>
    %38 = math.exp %37 : vector<8x1xf32>
    %39 = vector.broadcast %36 : vector<8x1xf32> to vector<8x8xf32>
    %40 = arith.subf %32, %39 : vector<8x8xf32>
    %41 = math.exp %40 : vector<8x8xf32>
    %c0_18 = arith.constant 0 : index
    %c0_19 = arith.constant 0 : index
    %42 = vector.load %arg8[%c0_18, %c0_19] : memref<8x1xf32, #tpu.memory_space<vmem>>, vector<8x1xf32>
    %43 = arith.mulf %38, %42 : vector<8x1xf32>
    %cst_20 = arith.constant dense<0.000000e+00> : vector<8xf32>
    %44 = vector.multi_reduction <add>, %41, %cst_20 [1] : vector<8x8xf32> to vector<8xf32>
    %45 = vector.shape_cast %44 : vector<8xf32> to vector<8x1xf32>
    %46 = arith.addf %43, %45 : vector<8x1xf32>
    %c0_21 = arith.constant 0 : index
    %c0_22 = arith.constant 0 : index
    %47 = vector.load %arg8[%c0_21, %c0_22] : memref<8x1xf32, #tpu.memory_space<vmem>>, vector<8x1xf32>
    tpu.vector_store %arg8[%c0_21, %c0_22], %46 {strides = array<i32>} : memref<8x1xf32, #tpu.memory_space<vmem>>, vector<8x1xf32>,
    %c0_23 = arith.constant 0 : index
    %c0_24 = arith.constant 0 : index
    %48 = vector.load %arg9[%c0_23, %c0_24] : memref<8x32xf32, #tpu.memory_space<vmem>>, vector<8x32xf32>
    %49 = vector.broadcast %38 : vector<8x1xf32> to vector<8x32xf32>
    %50 = arith.mulf %49, %48 : vector<8x32xf32>
    %cst_25 = arith.constant dense<0.000000e+00> : vector<8x32xf32>
    %51 = tpu.matmul %41, %30, %cst_25 {dimension_numbers = #tpu.dot_dimension_numbers<[1], [0], [0], [1], [0, 0, 1, 1], [], []>} : vector<8x8xf32>, vector<8x32xf32>, vector<8x32xf32> -> vector<8x32xf32>
    %52 = arith.addf %50, %51 : vector<8x32xf32>
    %c0_26 = arith.constant 0 : index
    %c0_27 = arith.constant 0 : index
    %53 = vector.load %arg9[%c0_26, %c0_27] : memref<8x32xf32, #tpu.memory_space<vmem>>, vector<8x32xf32>
    tpu.vector_store %arg9[%c0_26, %c0_27], %52 {strides = array<i32>} : memref<8x32xf32, #tpu.memory_space<vmem>>, vector<8x32xf32>,
    %c0_28 = arith.constant 0 : index
    %c0_29 = arith.constant 0 : index
    %54 = vector.load %arg7[%c0_28, %c0_29] : memref<8x1xf32, #tpu.memory_space<vmem>>, vector<8x1xf32>
    tpu.vector_store %arg7[%c0_28, %c0_29], %36 {strides = array<i32>} : memref<8x1xf32, #tpu.memory_space<vmem>>, vector<8x1xf32>,
    %c0_i32_30 = arith.constant 0 : i32
    %55 = arith.cmpi eq, %arg1, %c0_i32_30 : i32
    %56 = arith.extui %55 : i1 to i32
    %c0_i32_31 = arith.constant 0 : i32
    %57 = arith.cmpi ne, %56, %c0_i32_31 : i32
    scf.if %57 {
      %c0_32 = arith.constant 0 : index
      %c0_33 = arith.constant 0 : index
      %58 = vector.load %arg8[%c0_32, %c0_33] : memref<8x1xf32, #tpu.memory_space<vmem>>, vector<8x1xf32>
      %59 = tpu.reciprocal %58 : vector<8x1xf32> -> vector<8x1xf32>
      %c0_34 = arith.constant 0 : index
      %c0_35 = arith.constant 0 : index
      %60 = vector.load %arg9[%c0_34, %c0_35] : memref<8x32xf32, #tpu.memory_space<vmem>>, vector<8x32xf32>
      %61 = vector.broadcast %59 : vector<8x1xf32> to vector<8x32xf32>
      %62 = arith.mulf %60, %61 : vector<8x32xf32>
      %c0_36 = arith.constant 0 : index
      %c0_37 = arith.constant 0 : index
      %c0_38 = arith.constant 0 : index
      %63 = vector.load %arg6[%c0_36, %c0_37, %c0_38] : memref<1x8x32xf32, #tpu.memory_space<vmem>>, vector<1x8x32xf32>
      %64 = vector.shape_cast %63 : vector<1x8x32xf32> to vector<8x32xf32>
      %65 = vector.shape_cast %62 : vector<8x32xf32> to vector<1x8x32xf32>
      tpu.vector_store %arg6[%c0_36, %c0_37, %c0_38], %65 {strides = array<i32>} : memref<1x8x32xf32, #tpu.memory_space<vmem>>, vector<1x8x32xf32>,
    } else {
    }
    return
  }
  func.func @transform_0(%arg0: i32, %arg1: i32) -> (i32, i32, i32) {
    %c0_i32 = arith.constant 0 : i32
    %c0_i32_0 = arith.constant 0 : i32
    return %arg0, %arg1, %c0_i32 : i32, i32, i32
  }
  func.func @transform_1(%arg0: i32, %arg1: i32) -> (i32, i32) {
    %c0_i32 = arith.constant 0 : i32
    %c0_i32_0 = arith.constant 0 : i32
    %c0_i32_1 = arith.constant 0 : i32
    return %c0_i32, %c0_i32_0 : i32, i32
  }
  func.func @transform_2(%arg0: i32, %arg1: i32) -> (i32, i32) {
    %c0_i32 = arith.constant 0 : i32
    %c0_i32_0 = arith.constant 0 : i32
    %c0_i32_1 = arith.constant 0 : i32
    return %c0_i32, %c0_i32_0 : i32, i32
  }
  func.func @transform_3(%arg0: i32, %arg1: i32) -> (i32, i32) {
    %c0_i32 = arith.constant 0 : i32
    %c0_i32_0 = arith.constant 0 : i32
    %c0_i32_1 = arith.constant 0 : i32
    return %c0_i32, %c0_i32_0 : i32, i32
  }
  func.func @transform_4(%arg0: i32, %arg1: i32) -> (i32, i32, i32) {
    %c0_i32 = arith.constant 0 : i32
    %c0_i32_0 = arith.constant 0 : i32
    %c0_i32_1 = arith.constant 0 : i32
    return %arg0, %c0_i32, %c0_i32_0 : i32, i32, i32
  }
}

</mosaic_0001>

<llo_original>
// kernel: tpu_custom_call.1
$region0: #{tpu_custom_call.1}
  #allocation0 [shape = 'u32[]', space=smem, size = 0x4, offset = 0x4, fixed_abs, tag = 'smem constant byte address 0x4 - core index']
  #allocation1 [shape = 'u32[144,128]{1,0:T(1,128)}', space=vmem, size = 0x12000, scoped, tag = 'internal scratch']
  #allocation2 [shape = 'f32[8,1]{1,0:T(8,128)}', space=vmem, size = 0x1000, scoped, tag = 'scratch operand']
  #allocation3 [shape = 'f32[8,1]{1,0:T(8,128)}', space=vmem, size = 0x1000, scoped, tag = 'scratch operand']
  #allocation4 [shape = 'f32[8,32]{1,0:T(8,128)}', space=vmem, size = 0x1000, scoped, tag = 'scratch operand']
  %s0 = inlined_call_operand.hbm [shape: f32[2,8,32], index: 0, kind: input, shape index: {}]
  %s1 = inlined_call_operand.hbm [shape: f32[8,32], index: 1, kind: input, shape index: {}]
  %s2 = inlined_call_operand.vmem [shape: f32[1,32], index: 2, kind: input, shape index: {}]
  %s3 = inlined_call_operand.vmem [shape: f32[1,32], index: 3, kind: input, shape index: {}]
  %s4 = inlined_call_operand.hbm [shape: f32[2,8,32], index: 4, kind: output, shape index: {}]
  %s5 = sld [smem:[#allocation0]]
  $region65: #{tpu_custom_call.1} parent=0
    _
  %s7 = ssub.s32 1, %s5
  %s8 = scalar_select 0, %s7, %s5
  $region1: #{tpu_custom_call.1} parent=0
    #allocation5 [shape = 'u8[8192]{0}', space=vmem, size = 0x2000, scoped, tag = 'input window, operand 0']
    #allocation6 [shape = 's32[2]{0}', space=sflag, size = 0x8, scoped, tag = 'scoped memory for tpu_custom_call.1']
    #allocation7 [shape = 's32[2]{0}', space=sflag, size = 0x8, scoped, tag = 'scoped memory for tpu_custom_call.1']
    #allocation8 [shape = 'u8[4096]{0}', space=vmem, size = 0x1000, scoped, tag = 'input window, operand 1, single buffered']
    #allocation9 [shape = 's32[1]{0}', space=sflag, size = 0x4, scoped, tag = 'scoped memory for tpu_custom_call.1']
    #allocation10 [shape = 'u8[8192]{0}', space=vmem, size = 0x2000, scoped, tag = 'output window, operand 0']
    %9 = vsyncpa [#allocation6], 0
    %s10 = scalar_lea.sflag [#allocation6], 1
    %11 = vsyncpa %s10, 0
    %12 = vsyncpa [#allocation9], 0
    %13 = vsyncpa [#allocation7], 0
    %s14 = scalar_lea.sflag [#allocation7], 1
    %15 = vsyncpa %s14, 0
    loop: start=0, step=1, limit=4
    $region2: #{tpu_custom_call.1} parent=1 // loop_pre_header
      _
    $region3: #{tpu_custom_call.1} parent=1 // loop_header
      %s17 = sphi 0, %s21
      %p18 = scmp.ge.s32.totalorder %s17, 4
      %s24 = sphi 0, %s36
      %s25 = sphi 0, %s32
      %s26 = sphi 0, %s24
      %s27 = sphi 0, %s25
      %s28 = sphi 0, %s26
      %s29 = sphi 0, %s27
      %s41 = sphi 0, %s43
      %s44 = sphi 0, %s41
      %s45 = sphi 0, %s44
      %s61 = sphi 0, %s45
      %s65 = sphi 0, %s65
      %s67 = sphi 0, %s65
      %s68 = sphi 0, %s67
      %s82 = sphi 0, %s68
      %s86 = sphi 0, %s86
      %s88 = sphi 0, %s86
      %s89 = sphi 0, %s88
      %s103 = sphi 0, %s89
      %s107 = sphi 0, %s107
      %s109 = sphi 0, %s107
      %s110 = sphi 0, %s109
      %s124 = sphi 0, %s110
      %s130 = sphi 0, %s132
      %s133 = sphi 0, %s130
      %s134 = sphi 0, %s133
      %s150 = sphi 0, %s134
    $region4: #{tpu_custom_call.1} parent=1 // loop_header_branch
      %20 = sbr.rel (%p18) target = $region8
    $region5: #{tpu_custom_call.1} parent=1 // loop_body
      %s22 = ssub.s32 %s17, 1
      %s23 = ssub.s32 %s17, 2
      %s30 = sadd.s32 1, %s25
      %p31 = scmp.ge.s32.totalorder %s30, 1
      %s32 = scalar_select %p31, 0, %s30
      %s33 = sadd.s32 1, %s24
      %s34 = scalar_select %p31, %s33, %s24
      %p35 = scmp.ge.s32.totalorder %s34, 2
      %s36 = scalar_select %p35, 0, %s34
      %s37 = ssub.s32 %s24, %s36
      %s38 = ssub.s32 %s25, %s32
      %s39 = sor.u32 %s37, %s38
      %p40 = scmp.eq.s32.totalorder %s39, 0
      %s42 = sadd.s32 %s41, 1
      %s43 = scalar_select %p40, %s41, %s42
      %p46 = pneg %p40
      %p47 = scmp.eq.s32.totalorder %s17, 1
      %p48 = por %p46, %p47
      %p49 = scmp.ne.s32.totalorder %s41, %s44
      %p50 = scmp.eq.s32.totalorder %s17, 0
      %p51 = por %p49, %p50
      %p52 = scmp.ne.s32.totalorder %s41, %s44
      %p53 = scmp.eq.s32.totalorder %s22, 1
      %p54 = por %p52, %p53
      %p55 = scmp.ne.s32.totalorder %s44, %s45
      %p56 = scmp.eq.s32.totalorder %s22, 0
      %p57 = por %p55, %p56
      %p58 = scmp.ne.s32.totalorder %s44, %s45
      %p59 = scmp.eq.s32.totalorder %s23, 1
      %p60 = por %p58, %p59
      %p62 = scmp.ne.s32.totalorder %s45, %s61
      %p63 = scmp.eq.s32.totalorder %s23, 0
      %p64 = por %p62, %p63
      %s66 = sadd.s32 %s65, 1
      %p69 = scmp.eq.s32.totalorder %s17, 1
      %p70 = scmp.ne.s32.totalorder %s65, %s67
      %p71 = scmp.eq.s32.totalorder %s17, 0
      %p72 = por %p70, %p71
      %p73 = scmp.ne.s32.totalorder %s65, %s67
      %p74 = scmp.eq.s32.totalorder %s22, 1
      %p75 = por %p73, %p74
      %p76 = scmp.ne.s32.totalorder %s67, %s68
      %p77 = scmp.eq.s32.totalorder %s22, 0
      %p78 = por %p76, %p77
      %p79 = scmp.ne.s32.totalorder %s67, %s68
      %p80 = scmp.eq.s32.totalorder %s23, 1
      %p81 = por %p79, %p80
      %p83 = scmp.ne.s32.totalorder %s68, %s82
      %p84 = scmp.eq.s32.totalorder %s23, 0
      %p85 = por %p83, %p84
      %s87 = sadd.s32 %s86, 1
      %p90 = scmp.eq.s32.totalorder %s17, 1
      %p91 = scmp.ne.s32.totalorder %s86, %s88
      %p92 = scmp.eq.s32.totalorder %s17, 0
      %p93 = por %p91, %p92
      %p94 = scmp.ne.s32.totalorder %s86, %s88
      %p95 = scmp.eq.s32.totalorder %s22, 1
      %p96 = por %p94, %p95
      %p97 = scmp.ne.s32.totalorder %s88, %s89
      %p98 = scmp.eq.s32.totalorder %s22, 0
      %p99 = por %p97, %p98
      %p100 = scmp.ne.s32.totalorder %s88, %s89
      %p101 = scmp.eq.s32.totalorder %s23, 1
      %p102 = por %p100, %p101
      %p104 = scmp.ne.s32.totalorder %s89, %s103
      %p105 = scmp.eq.s32.totalorder %s23, 0
      %p106 = por %p104, %p105
      %s108 = sadd.s32 %s107, 1
      %p111 = scmp.eq.s32.totalorder %s17, 1
      %p112 = scmp.ne.s32.totalorder %s107, %s109
      %p113 = scmp.eq.s32.totalorder %s17, 0
      %p114 = por %p112, %p113
      %p115 = scmp.ne.s32.totalorder %s107, %s109
      %p116 = scmp.eq.s32.totalorder %s22, 1
      %p117 = por %p115, %p116
      %p118 = scmp.ne.s32.totalorder %s109, %s110
      %p119 = scmp.eq.s32.totalorder %s22, 0
      %p120 = por %p118, %p119
      %p121 = scmp.ne.s32.totalorder %s109, %s110
      %p122 = scmp.eq.s32.totalorder %s23, 1
      %p123 = por %p121, %p122
      %p125 = scmp.ne.s32.totalorder %s110, %s124
      %p126 = scmp.eq.s32.totalorder %s23, 0
      %p127 = por %p125, %p126
      %s128 = ssub.s32 %s24, %s36
      %p129 = scmp.eq.s32.totalorder %s128, 0
      %s131 = sadd.s32 %s130, 1
      %s132 = scalar_select %p129, %s130, %s131
      %p135 = pneg %p129
      %p136 = scmp.eq.s32.totalorder %s17, 1
      %p137 = por %p135, %p136
      %p138 = scmp.ne.s32.totalorder %s130, %s133
      %p139 = scmp.eq.s32.totalorder %s17, 0
      %p140 = por %p138, %p139
      %p141 = scmp.ne.s32.totalorder %s130, %s133
      %p142 = scmp.eq.s32.totalorder %s22, 1
      %p143 = por %p141, %p142
      %p144 = scmp.ne.s32.totalorder %s133, %s134
      %p145 = scmp.eq.s32.totalorder %s22, 0
      %p146 = por %p144, %p145
      %p147 = scmp.ne.s32.totalorder %s133, %s134
      %p148 = scmp.eq.s32.totalorder %s23, 1
      %p149 = por %p147, %p148
      %p151 = scmp.ne.s32.totalorder %s134, %s150
      %p152 = scmp.eq.s32.totalorder %s23, 0
      %p153 = por %p151, %p152
      %p154 = scmp.le.s32.totalorder 1, %s17
      %p155 = scmp.lt.s32.totalorder %s17, 3
      %p156 = pnand %p154, %p155
      %p157 = pneg %p156
      // Predicated region
      $region9: #{tpu_custom_call.1} parent=5 // pred_check
        _
      $region10: #{tpu_custom_call.1} parent=5 // pred_check_branch
        %159 = sbr.rel (%p156) target = $region12
      $region11: #{tpu_custom_call.1} parent=5 // pred_region
        %s160 = ssub.s32 %s17, 1
        // Predicated region
        $region13: #{tpu_custom_call.1} parent=11 // pred_check
          %p161 = pneg %p78
        $region14: #{tpu_custom_call.1} parent=11 // pred_check_branch
          %163 = sbr.rel (%p161) target = $region16
        $region15: #{tpu_custom_call.1} parent=11 // pred_region
          %s165 = ssub.s32 128, 128
          %166 = vsyncadd [#allocation9], %s165
          %s168 = sshll.u32 [#allocation8], 4
          %s169 = int_to_ptr.vmem [resolvable:$true] %s168
          %171 = dma.hbm_to_vmem [thread:$0]  %s1, 128, %s169, [#allocation9]
        $region16: #{tpu_custom_call.1} parent=11 // pred_fallthru
          _
        // Predicated region
        $region17: #{tpu_custom_call.1} parent=11 // pred_check
          %p172 = pneg %p99
        $region18: #{tpu_custom_call.1} parent=11 // pred_check_branch
          %174 = sbr.rel (%p172) target = $region20
        $region19: #{tpu_custom_call.1} parent=11 // pred_region
          _
        $region20: #{tpu_custom_call.1} parent=11 // pred_fallthru
          _
        // Predicated region
        $region21: #{tpu_custom_call.1} parent=11 // pred_check
          %p175 = pneg %p120
        $region22: #{tpu_custom_call.1} parent=11 // pred_check_branch
          %177 = sbr.rel (%p175) target = $region24
        $region23: #{tpu_custom_call.1} parent=11 // pred_region
          _
        $region24: #{tpu_custom_call.1} parent=11 // pred_fallthru
          _
      $region12: #{tpu_custom_call.1} parent=5 // pred_fallthru
        _
      %p178 = scmp.lt.s32.totalorder %s17, 2
      // Predicated region
      $region25: #{tpu_custom_call.1} parent=5 // pred_check
        %p179 = pneg %p178
      $region26: #{tpu_custom_call.1} parent=5 // pred_check_branch
        %181 = sbr.rel (%p179) target = $region28
      $region27: #{tpu_custom_call.1} parent=5 // pred_region
        // Predicated region
        $region29: #{tpu_custom_call.1} parent=27 // pred_check
          %p182 = pneg %p51
        $region30: #{tpu_custom_call.1} parent=27 // pred_check_branch
          %184 = sbr.rel (%p182) target = $region32
        $region31: #{tpu_custom_call.1} parent=27 // pred_region
          %s185 = sand.u32 %s41, 1
          %s186 = scalar_lea.sflag [#allocation6], %s185
          %s187 = sand.u32 %s41, 1
          %s188 = smul.addr %s187, 8
          %s189 = scalar_lea.vmem [#allocation5], %s188
          %s191 = ssub.s32 128, 128
          %192 = vsyncadd %s186, %s191
          %s193 = sadd.s32 %s25, %s24
          %s194 = smul.addr %s193, 128
          %s195 = scalar_lea.hbm %s0, %s194
          %s197 = sshll.u32 %s189, 4
          %s198 = int_to_ptr.vmem [resolvable:$true] %s197
          %200 = dma.hbm_to_vmem [thread:$0]  %s195, 128, %s198, %s186
        $region32: #{tpu_custom_call.1} parent=27 // pred_fallthru
          _
      $region28: #{tpu_custom_call.1} parent=5 // pred_fallthru
        _
      %p201 = scmp.le.s32.totalorder 1, %s17
      %p202 = scmp.lt.s32.totalorder %s17, 3
      %p203 = pnand %p201, %p202
      %p204 = pneg %p203
      // Predicated region
      $region33: #{tpu_custom_call.1} parent=5 // pred_check
        _
      $region34: #{tpu_custom_call.1} parent=5 // pred_check_branch
        %206 = sbr.rel (%p203) target = $region36
      $region35: #{tpu_custom_call.1} parent=5 // pred_region
        %s207 = ssub.s32 %s17, 1
        %s208 = sand.u32 %s44, 1
        %s209 = scalar_lea.sflag [#allocation6], %s208
        %s210 = sand.u32 %s44, 1
        %s211 = smul.addr %s210, 8
        %s212 = scalar_lea.vmem [#allocation5], %s211
        // Predicated region
        $region37: #{tpu_custom_call.1} parent=35 // pred_check
          %p213 = pneg %p57
        $region38: #{tpu_custom_call.1} parent=35 // pred_check_branch
          %215 = sbr.rel (%p213) target = $region40
        $region39: #{tpu_custom_call.1} parent=35 // pred_region
          %216 = dma.done %s209, 128
        $region40: #{tpu_custom_call.1} parent=35 // pred_fallthru
          _
        // Predicated region
        $region41: #{tpu_custom_call.1} parent=35 // pred_check
          %p217 = pneg %p78
        $region42: #{tpu_custom_call.1} parent=35 // pred_check_branch
          %219 = sbr.rel (%p217) target = $region44
        $region43: #{tpu_custom_call.1} parent=35 // pred_region
          %220 = dma.done [#allocation9], 128
        $region44: #{tpu_custom_call.1} parent=35 // pred_fallthru
          _
        %s221 = sand.u32 %s44, 1
        %s222 = scalar_lea.sflag [#allocation6], %s221
        %s223 = sand.u32 %s44, 1
        %s224 = smul.addr %s223, 8
        %s225 = scalar_lea.vmem [#allocation5], %s224
        %p226 = pneg %p57
        %p227 = pneg %p54
        %p228 = pneg %p78
        %p229 = pneg %p75
        %p230 = pneg %p99
        %p231 = pneg %p96
        %p232 = pneg %p120
        %p233 = pneg %p117
        %p234 = pneg %p146
        %p235 = pneg %p143
        %s236 = sand.u32 %s133, 1
        %s237 = scalar_lea.sflag [#allocation7], %s236
        %s238 = sand.u32 %s133, 1
        %s239 = smul.addr %s238, 8
        %s240 = scalar_lea.vmem [#allocation10], %s239
        %p241 = scmp.eq.s32.totalorder %s27, 0
        // Predicated region
        $region45: #{tpu_custom_call.1} parent=35 // pred_check
          %p242 = pneg %p241
        $region46: #{tpu_custom_call.1} parent=35 // pred_check_branch
          %244 = sbr.rel (%p242) target = $region48
        $region47: #{tpu_custom_call.1} parent=35 // pred_region
          %vm245 = vcmask 7168
          %246 = vst.msk [vmem:[#allocation2] sm:$0xff] %vm245, -inf
          %247 = vst.msk [vmem:[#allocation3] sm:$0xff] %vm245, 0.0
          %vm248 = vcmask 261120
          %249 = vst.msk [vmem:[#allocation4] sm:$0xff] %vm248, 0.0
        $region48: #{tpu_custom_call.1} parent=35 // pred_fallthru
          _
        %v250 = vld [vmem:[%s212] sm:$0xff]
        %vm251 = vcmask 261120
        %v252 = vsel %vm251, %v250, 0.0
        %253 = vadd.xlane.f32.xlu0 %v252
        %v254 = vpop.xlane.xlu0 %253
        %v255 = vrcp.pop 32.0
        %v256 = vmul.f32 %v254, %v255
        %v257 = vmul.f32 %v250, %v250
        %v258 = vsel %vm251, %v257, 0.0
        %259 = vadd.xlane.f32.xlu0 %v258
        %v260 = vpop.xlane.xlu0 %259
        %v261 = vmul.f32 %v260, %v255
        %v262 = vmul.f32 %v256, %v256
        %v263 = vsub.f32 %v261, %v262
        %v264 = vmax.f32 %v263, 0.0
        %v265 = vadd.f32 %v264, 1e-05
        %v266 = vrsqrt.pop %v265
        %v267 = vsub.f32 %v250, %v256
        %v268 = vmul.f32 %v267, %v266
        %v269 = vld [vmem:[%s2] sm:$0x1]
        %v271 = vlaneseq
        %v272 = vshrl.u32 %v271, 7
        %v273 = vsub.s32 0, %v272
        %v274 = vrot.slane %v269, %v273
        %v276 = vmul.f32 %v268, %v274
        %v277 = vld [vmem:[%s3] sm:$0x1]
        %v279 = vlaneseq
        %v280 = vshrl.u32 %v279, 7
        %v281 = vsub.s32 0, %v280
        %v282 = vrot.slane %v277, %v281
        %v284 = vadd.f32 %v276, %v282
        %v285 = vld [vmem:[#allocation8] sm:$0xff]
        %v287 = vsel %vm251, %v285, 0
        %v290 = vsel %vm251, %v284, 0
        %292 = vmatprep.subr.mxu0 0.0
        %293 = vmatpush1.xpose.msra.mxu0 %v290
        %294 = vmatprep.subr.mxu0 0.0
        %295 = vmatpush1.xpose.msra.mxu0 0.0
        %296 = vmatprep.subr.mxu0 0.0
        %297 = vmatpush1.xpose.msra.mxu0 0.0
        %298 = vmatprep.subr.mxu0 0.0
        %299 = vmatpush1.xpose.msra.mxu0 0.0
        %300 = vmatprep.subr.mxu0 0.0
        %301 = vmatpush1.xpose.msra.mxu0 0.0
        %302 = vmatprep.subr.mxu0 0.0
        %303 = vmatpush1.xpose.msra.mxu0 0.0
        %304 = vmatprep.subr.mxu0 0.0
        %305 = vmatpush1.xpose.msra.mxu0 0.0
        %306 = vmatprep.subr.mxu0 0.0
        %307 = vmatpush1.xpose.msra.mxu0 0.0
        %308 = vmatprep.subr.mxu0 0.0
        %309 = vmatpush1.xpose.msra.mxu0 0.0
        %310 = vmatprep.subr.mxu0 0.0
        %311 = vmatpush1.xpose.msra.mxu0 0.0
        %312 = vmatprep.subr.mxu0 0.0
        %313 = vmatpush1.xpose.msra.mxu0 0.0
        %314 = vmatprep.subr.mxu0 0.0
        %315 = vmatpush1.xpose.msra.mxu0 0.0
        %316 = vmatprep.subr.mxu0 0.0
        %317 = vmatpush1.xpose.msra.mxu0 0.0
        %318 = vmatprep.subr.mxu0 0.0
        %319 = vmatpush1.xpose.msra.mxu0 0.0
        %320 = vmatprep.subr.mxu0 0.0
        %321 = vmatpush1.xpose.msra.mxu0 0.0
        %322 = vmatprep.subr.mxu0 0.0
        %323 = vmatpush1.xpose.msra.mxu0 0.0
        %324 = vmatprep.subr.mxu0 0.0
        %325 = vmatpush1.xpose.msra.mxu0 0.0
        %326 = vmatprep.subr.mxu0 0.0
        %327 = vmatpush1.xpose.msra.mxu0 0.0
        %328 = vmatprep.subr.mxu0 0.0
        %329 = vmatpush1.xpose.msra.mxu0 0.0
        %330 = vmatprep.subr.mxu0 0.0
        %331 = vmatpush1.xpose.msra.mxu0 0.0
        %332 = vmatprep.subr.mxu0 0.0
        %333 = vmatpush1.xpose.msra.mxu0 0.0
        %334 = vmatprep.subr.mxu0 0.0
        %335 = vmatpush1.xpose.msra.mxu0 0.0
        %336 = vmatprep.subr.mxu0 0.0
        %337 = vmatpush1.xpose.msra.mxu0 0.0
        %338 = vmatprep.subr.mxu0 0.0
        %339 = vmatpush1.xpose.msra.mxu0 0.0
        %340 = vmatprep.subr.mxu0 0.0
        %341 = vmatpush1.xpose.msra.mxu0 0.0
        %342 = vmatprep.subr.mxu0 0.0
        %343 = vmatpush1.xpose.msra.mxu0 0.0
        %344 = vmatprep.subr.mxu0 0.0
        %345 = vmatpush1.xpose.msra.mxu0 0.0
        %346 = vmatprep.subr.mxu0 0.0
        %347 = vmatpush1.xpose.msra.mxu0 0.0
        %348 = vmatprep.subr.mxu0 0.0
        %349 = vmatpush1.xpose.msra.mxu0 0.0
        %350 = vmatprep.subr.mxu0 0.0
        %351 = vmatpush1.xpose.msra.mxu0 0.0
        %352 = vmatprep.subr.mxu0 0.0
        %353 = vmatpush1.xpose.msra.mxu0 0.0
        %354 = vmatprep.subr.mxu0 0.0
        %355 = vmatpush1.xpose.msra.mxu0 0.0
        %356 = vmatprep.mubr.f32.mxu0 0.0
        %357 = vmatmul.mubr.f32.gmra.mrb[0].mxu0 %v287
        %v358 = vpop.f32.mrb[0].mxu0
        %v359 = vadd.f32 0.0, %v358
        %v360 = vpop.f32.mrb[0].mxu0
        %361 = vdwg.mxu0
        %v362 = vld [vmem:[#allocation2] sm:$0xff]
        %vm363 = vcmask 64512
        %v364 = vsel %vm363, %v359, -inf
        %365 = vmax.xlane.f32.xlu0 %v364
        %v366 = vpop.xlane.xlu0 %365
        %v367 = vmax.f32 %v362, %v366
        %v368 = vsub.f32 %v362, %v367
        %v369 = vmul.f32 %v368, 1.442695
        %v370 = vpow.pop %v369
        %372 = vset.pattern.permute.xlu0 0
        %373 = vperm.xlu0 %372, %v367
        %v374 = vpop.permute.xlu0 %373
        %v376 = vsub.f32 %v359, %v374
        %v377 = vmul.f32 %v376, 1.442695
        %v378 = vpow.pop %v377
        %v379 = vld [vmem:[#allocation3] sm:$0xff]
        %v380 = vmul.f32 %v370, %v379
        %v381 = vsel %vm363, %v378, 0.0
        %382 = vadd.xlane.f32.xlu0 %v381
        %v383 = vpop.xlane.xlu0 %382
        %v384 = vadd.f32 %v380, %v383
        %vm385 = vcmask 7168
        %386 = vst.msk [vmem:[#allocation3] sm:$0xff] %vm385, %v384
        %v387 = vld [vmem:[#allocation4] sm:$0xff]
        %389 = vset.pattern.permute.xlu0 0
        %390 = vperm.xlu0 %389, %v370
        %v391 = vpop.permute.xlu0 %390
        %v393 = vmul.f32 %v391, %v387
        %v395 = vsel %vm363, %v378, 0
        %397 = vmatprep.subr.mxu0 0.0
        %398 = vmatpush1.msra.mxu0 %v284
        %399 = vmatprep.subr.mxu0 0.0
        %400 = vmatpush1.msra.mxu0 0.0
        %401 = vmatprep.subr.mxu0 0.0
        %402 = vmatpush1.msra.mxu0 0.0
        %403 = vmatprep.subr.mxu0 0.0
        %404 = vmatpush1.msra.mxu0 0.0
        %405 = vmatprep.subr.mxu0 0.0
        %406 = vmatpush1.msra.mxu0 0.0
        %407 = vmatprep.subr.mxu0 0.0
        %408 = vmatpush1.msra.mxu0 0.0
        %409 = vmatprep.subr.mxu0 0.0
        %410 = vmatpush1.msra.mxu0 0.0
        %411 = vmatprep.subr.mxu0 0.0
        %412 = vmatpush1.msra.mxu0 0.0
        %413 = vmatprep.subr.mxu0 0.0
        %414 = vmatpush1.msra.mxu0 0.0
        %415 = vmatprep.subr.mxu0 0.0
        %416 = vmatpush1.msra.mxu0 0.0
        %417 = vmatprep.subr.mxu0 0.0
        %418 = vmatpush1.msra.mxu0 0.0
        %419 = vmatprep.subr.mxu0 0.0
        %420 = vmatpush1.msra.mxu0 0.0
        %421 = vmatprep.subr.mxu0 0.0
        %422 = vmatpush1.msra.mxu0 0.0
        %423 = vmatprep.subr.mxu0 0.0
        %424 = vmatpush1.msra.mxu0 0.0
        %425 = vmatprep.subr.mxu0 0.0
        %426 = vmatpush1.msra.mxu0 0.0
        %427 = vmatprep.subr.mxu0 0.0
        %428 = vmatpush1.msra.mxu0 0.0
        %429 = vmatprep.subr.mxu0 0.0
        %430 = vmatpush1.msra.mxu0 0.0
        %431 = vmatprep.subr.mxu0 0.0
        %432 = vmatpush1.msra.mxu0 0.0
        %433 = vmatprep.subr.mxu0 0.0
        %434 = vmatpush1.msra.mxu0 0.0
        %435 = vmatprep.subr.mxu0 0.0
        %436 = vmatpush1.msra.mxu0 0.0
        %437 = vmatprep.subr.mxu0 0.0
        %438 = vmatpush1.msra.mxu0 0.0
        %439 = vmatprep.subr.mxu0 0.0
        %440 = vmatpush1.msra.mxu0 0.0
        %441 = vmatprep.subr.mxu0 0.0
        %442 = vmatpush1.msra.mxu0 0.0
        %443 = vmatprep.subr.mxu0 0.0
        %444 = vmatpush1.msra.mxu0 0.0
        %445 = vmatprep.subr.mxu0 0.0
        %446 = vmatpush1.msra.mxu0 0.0
        %447 = vmatprep.subr.mxu0 0.0
        %448 = vmatpush1.msra.mxu0 0.0
        %449 = vmatprep.subr.mxu0 0.0
        %450 = vmatpush1.msra.mxu0 0.0
        %451 = vmatprep.subr.mxu0 0.0
        %452 = vmatpush1.msra.mxu0 0.0
        %453 = vmatprep.subr.mxu0 0.0
        %454 = vmatpush1.msra.mxu0 0.0
        %455 = vmatprep.subr.mxu0 0.0
        %456 = vmatpush1.msra.mxu0 0.0
        %457 = vmatprep.subr.mxu0 0.0
        %458 = vmatpush1.msra.mxu0 0.0
        %459 = vmatprep.subr.mxu0 0.0
        %460 = vmatpush1.msra.mxu0 0.0
        %461 = vmatprep.mubr.f32.mxu0 0.0
        %462 = vmatmul.mubr.f32.gmra.mrb[0].mxu0 %v395
        %v463 = vpop.f32.mrb[0].mxu0
        %v464 = vadd.f32 0.0, %v463
        %v465 = vpop.f32.mrb[0].mxu0
        %466 = vdwg.mxu0
        %v467 = vadd.f32 %v393, %v464
        %468 = vst.msk [vmem:[#allocation4] sm:$0xff] %vm251, %v467
        %469 = vst.msk [vmem:[#allocation2] sm:$0xff] %vm385, %v367
        // Predicated region
        $region49: #{tpu_custom_call.1} parent=35 // pred_check
          %p470 = pneg %p241
        $region50: #{tpu_custom_call.1} parent=35 // pred_check_branch
          %472 = sbr.rel (%p470) target = $region52
        $region51: #{tpu_custom_call.1} parent=35 // pred_region
          %v473 = vld [vmem:[#allocation3] sm:$0xff]
          %v474 = vrcp.pop %v473
          %v475 = vld [vmem:[#allocation4] sm:$0xff]
          %477 = vset.pattern.permute.xlu0 0
          %478 = vperm.xlu0 %477, %v474
          %v479 = vpop.permute.xlu0 %478
          %v481 = vmul.f32 %v475, %v479
          %482 = vst.msk [vmem:[%s240] sm:$0xff] %vm251, %v481
        $region52: #{tpu_custom_call.1} parent=35 // pred_fallthru
          _
        %s483 = sand.u32 %s133, 1
        %s484 = scalar_lea.sflag [#allocation7], %s483
        %s485 = sand.u32 %s133, 1
        %s486 = smul.addr %s485, 8
        %s487 = scalar_lea.vmem [#allocation10], %s486
        // Predicated region
        $region53: #{tpu_custom_call.1} parent=35 // pred_check
          %p488 = pneg %p143
        $region54: #{tpu_custom_call.1} parent=35 // pred_check_branch
          %490 = sbr.rel (%p488) target = $region56
        $region55: #{tpu_custom_call.1} parent=35 // pred_region
          %s492 = ssub.s32 128, 128
          %493 = vsyncadd %s484, %s492
          %s494 = smul.addr %s26, 128
          %s495 = scalar_lea.hbm %s4, %s494
          %s497 = sshll.u32 %s487, 4
          %s498 = int_to_ptr.vmem [resolvable:$true] %s497
          %500 = dma.vmem_to_hbm [thread:$0]  %s498, 128, %s495, %s484
        $region56: #{tpu_custom_call.1} parent=35 // pred_fallthru
          _
      $region36: #{tpu_custom_call.1} parent=5 // pred_fallthru
        _
      %p501 = scmp.le.s32.totalorder 2, %s17
      // Predicated region
      $region57: #{tpu_custom_call.1} parent=5 // pred_check
        %p502 = pneg %p501
      $region58: #{tpu_custom_call.1} parent=5 // pred_check_branch
        %504 = sbr.rel (%p502) target = $region60
      $region59: #{tpu_custom_call.1} parent=5 // pred_region
        %s505 = ssub.s32 %s17, 2
        // Predicated region
        $region61: #{tpu_custom_call.1} parent=59 // pred_check
          %p506 = pneg %p149
        $region62: #{tpu_custom_call.1} parent=59 // pred_check_branch
          %508 = sbr.rel (%p506) target = $region64
        $region63: #{tpu_custom_call.1} parent=59 // pred_region
          %s509 = sand.u32 %s134, 1
          %s510 = scalar_lea.sflag [#allocation7], %s509
          %s511 = sand.u32 %s134, 1
          %s512 = smul.addr %s511, 8
          %s513 = scalar_lea.vmem [#allocation10], %s512
          %514 = dma.done %s510, 128
        $region64: #{tpu_custom_call.1} parent=59 // pred_fallthru
          _
      $region60: #{tpu_custom_call.1} parent=5 // pred_fallthru
        _
    $region6: #{tpu_custom_call.1} parent=1 // loop_footer
      %s21 = sadd.s32 1, %s17
    $region7: #{tpu_custom_call.1} parent=1 // loop_footer_branch
      %16 = sbr.rel target = $region3
    $region8: #{tpu_custom_call.1} parent=1 // loop_exit
      _
    %515 = vsyncpa [#allocation6], 1
    %s516 = scalar_lea.sflag [#allocation6], 1
    %517 = vsyncpa %s516, 1
    %518 = vsyncpa [#allocation9], 1
    %519 = vsyncpa [#allocation7], 1
    %s520 = scalar_lea.sflag [#allocation7], 1
    %521 = vsyncpa %s520, 1

</llo_original>
